<compile_context>
chip_gen: v5e
topology: v5e:2x2
jax: 0.10.0
libtpu: 0.0.40
codegen_flags: <defaults>
</compile_context>

<pallas_src>
import functools

import jax
import jax.numpy as jnp
from jax.experimental import pallas as pl
from jax.experimental.pallas import tpu as pltpu

LANE = 128


def linear_sigmoid_kernel(w_ref, b_ref, x_ref, o_ref):
    # w_ref: (3,) SMEM   b_ref: (1,) SMEM
    # x_ref: (3, TR, 128) VMEM  -- batch dense over sublanes (TR) and lanes (128)
    # o_ref: (TR, 128)   VMEM  -- lane-dense output slab
    w0 = w_ref[0]
    w1 = w_ref[1]
    w2 = w_ref[2]
    b = b_ref[0]
    # Linear(3, 1) as explicit unrolled VPU FMAs (K=3 is far below MXU tiles;
    # no jnp.sum / XLU reduce needed).
    z = x_ref[0] * w0 + x_ref[1] * w1 + x_ref[2] * w2 + b
    # Sigmoid: exp on the EUP, reciprocal also on the EUP (approx) -> VALU free.
    o_ref[...] = pl.reciprocal(1.0 + jnp.exp(-z), approx=True)


@functools.partial(jax.jit, static_argnames=("tile_rows",))
def custom_model_forward(x, weight, bias, *, tile_rows=16):
    n, k = x.shape
    assert k == 3
    block = tile_rows * LANE                      # batch rows per grid step (2048)
    n_pad = max(pl.cdiv(n, block), 1) * block
    r = n_pad // LANE

    # Pad + transpose so batch fills lanes (128) and sublanes (tile_rows).
    xp = jnp.zeros((n_pad, k), jnp.float32).at[:n].set(x.astype(jnp.float32))
    x3 = xp.T.reshape(k, r, LANE)

    out = pl.pallas_call(
        linear_sigmoid_kernel,
        grid=(r // tile_rows,),
        in_specs=[
            # Parameters as SMEM scalars: no VMEM tile, no double-buffered DMA.
            pl.BlockSpec(memory_space=pltpu.MemorySpace.SMEM),
            pl.BlockSpec(memory_space=pltpu.MemorySpace.SMEM),
            pl.BlockSpec((k, tile_rows, LANE), lambda i: (0, i, 0)),
        ],
        out_specs=pl.BlockSpec((tile_rows, LANE), lambda i: (i, 0)),
        out_shape=jax.ShapeDtypeStruct((r, LANE), jnp.float32),
        compiler_params=pltpu.CompilerParams(
            # Batch tiles are independent -> shard across the 2 TCs on v7x.
            dimension_semantics=("parallel",),
        ),
    )(
        weight.reshape(-1).astype(jnp.float32),
        bias.reshape(-1).astype(jnp.float32),
        x3,
    )

    # Back to the PyTorch layout (batch, 1).
    return out.reshape(n_pad, 1)[:n]


if __name__ == "__main__":
    key = jax.random.PRNGKey(0)
    kx, kw, kb = jax.random.split(key, 3)

    batch = 8
    in_features, out_features = 3, 1

    # Deterministic init mimicking nn.Linear default: U(-1/sqrt(fan_in), 1/sqrt(fan_in)).
    bound = 1.0 / jnp.sqrt(float(in_features))
    weight = jax.random.uniform(kw, (out_features, in_features), jnp.float32, -bound, bound)
    bias = jax.random.uniform(kb, (out_features,), jnp.float32, -bound, bound)

    x = jax.random.normal(kx, (batch, in_features), jnp.float32)

    out = custom_model_forward(x, weight, bias)
    jax.block_until_ready(out)

    # Reference check in plain JAX (approx EUP reciprocal -> small tolerance).
    ref = jax.nn.sigmoid(x @ weight.T + bias)
    assert out.shape == (batch, out_features)
    assert jnp.allclose(out, ref, atol=2e-3, rtol=2e-3), "mismatch vs reference"

    print("KERNEL_OK")
</pallas_src>

<mosaic_0001>
module attributes {stable_mosaic.version = 11 : i64} {
  func.func @linear_sigmoid_kernel(%arg0: i32, %arg1: memref<3xf32, #tpu.memory_space<smem>>, %arg2: memref<1xf32, #tpu.memory_space<smem>>, %arg3: memref<3x16x128xf32, #tpu.memory_space<vmem>>, %arg4: memref<16x128xf32, #tpu.memory_space<vmem>>) attributes {dimension_semantics = [#tpu.dimension_semantics<parallel>], iteration_bounds = array<i64: 1>, scalar_prefetch = 0 : i64, scratch_operands = 0 : i64, tpu.core_type = #tpu.core_type<tc>, window_params = [{transform_indices = @transform_0, window_bounds = array<i64: 3>}, {transform_indices = @transform_1, window_bounds = array<i64: 1>}, {transform_indices = @transform_2, window_bounds = array<i64: 3, 16, 128>}, {transform_indices = @transform_3, window_bounds = array<i64: 16, 128>}]} {
    %c0 = arith.constant 0 : index
    %0 = memref.load %arg1[%c0] : memref<3xf32, #tpu.memory_space<smem>>
    %c1 = arith.constant 1 : index
    %1 = memref.load %arg1[%c1] : memref<3xf32, #tpu.memory_space<smem>>
    %c2 = arith.constant 2 : index
    %2 = memref.load %arg1[%c2] : memref<3xf32, #tpu.memory_space<smem>>
    %c0_0 = arith.constant 0 : index
    %3 = memref.load %arg2[%c0_0] : memref<1xf32, #tpu.memory_space<smem>>
    %c0_1 = arith.constant 0 : index
    %c0_2 = arith.constant 0 : index
    %c0_3 = arith.constant 0 : index
    %4 = vector.load %arg3[%c0_1, %c0_2, %c0_3] : memref<3x16x128xf32, #tpu.memory_space<vmem>>, vector<1x16x128xf32>
    %5 = vector.shape_cast %4 : vector<1x16x128xf32> to vector<16x128xf32>
    %6 = vector.broadcast %0 : f32 to vector<16x128xf32>
    %7 = arith.mulf %5, %6 : vector<16x128xf32>
    %c1_4 = arith.constant 1 : index
    %c0_5 = arith.constant 0 : index
    %c0_6 = arith.constant 0 : index
    %8 = vector.load %arg3[%c1_4, %c0_5, %c0_6] : memref<3x16x128xf32, #tpu.memory_space<vmem>>, vector<1x16x128xf32>
    %9 = vector.shape_cast %8 : vector<1x16x128xf32> to vector<16x128xf32>
    %10 = vector.broadcast %1 : f32 to vector<16x128xf32>
    %11 = arith.mulf %9, %10 : vector<16x128xf32>
    %12 = arith.addf %7, %11 : vector<16x128xf32>
    %c2_7 = arith.constant 2 : index
    %c0_8 = arith.constant 0 : index
    %c0_9 = arith.constant 0 : index
    %13 = vector.load %arg3[%c2_7, %c0_8, %c0_9] : memref<3x16x128xf32, #tpu.memory_space<vmem>>, vector<1x16x128xf32>
    %14 = vector.shape_cast %13 : vector<1x16x128xf32> to vector<16x128xf32>
    %15 = vector.broadcast %2 : f32 to vector<16x128xf32>
    %16 = arith.mulf %14, %15 : vector<16x128xf32>
    %17 = arith.addf %12, %16 : vector<16x128xf32>
    %18 = vector.broadcast %3 : f32 to vector<16x128xf32>
    %19 = arith.addf %17, %18 : vector<16x128xf32>
    %cst = arith.constant 0.000000e+00 : f32
    %20 = vector.broadcast %cst : f32 to vector<16x128xf32>
    %21 = arith.subf %20, %19 : vector<16x128xf32>
    %22 = math.exp %21 : vector<16x128xf32>
    %cst_10 = arith.constant 1.000000e+00 : f32
    %23 = vector.broadcast %cst_10 : f32 to vector<16x128xf32>
    %24 = arith.addf %23, %22 : vector<16x128xf32>
    %25 = tpu.reciprocal %24 {approx = true} : vector<16x128xf32> -> vector<16x128xf32>
    %c0_11 = arith.constant 0 : index
    %c0_12 = arith.constant 0 : index
    %26 = vector.load %arg4[%c0_11, %c0_12] : memref<16x128xf32, #tpu.memory_space<vmem>>, vector<16x128xf32>
    tpu.vector_store %arg4[%c0_11, %c0_12], %25 {strides = array<i32>} : memref<16x128xf32, #tpu.memory_space<vmem>>, vector<16x128xf32>,
    return
  }
  func.func @transform_0(%arg0: i32) -> i32 {
    %c0_i32 = arith.constant 0 : i32
    %c0_i32_0 = arith.constant 0 : i32
    return %c0_i32 : i32
  }
  func.func @transform_1(%arg0: i32) -> i32 {
    %c0_i32 = arith.constant 0 : i32
    %c0_i32_0 = arith.constant 0 : i32
    return %c0_i32 : i32
  }
  func.func @transform_2(%arg0: i32) -> (i32, i32, i32) {
    %c0_i32 = arith.constant 0 : i32
    %c0_i32_0 = arith.constant 0 : i32
    %c0_i32_1 = arith.constant 0 : i32
    return %c0_i32, %arg0, %c0_i32_0 : i32, i32, i32
  }
  func.func @transform_3(%arg0: i32) -> (i32, i32) {
    %c0_i32 = arith.constant 0 : i32
    %c0_i32_0 = arith.constant 0 : i32
    return %arg0, %c0_i32 : i32, i32
  }
}

</mosaic_0001>

<llo_original>
// kernel: custom_model_forward.1
$region0: #{custom_model_forward.1}
  #allocation0 [shape = 'u32[]', space=smem, size = 0x4, offset = 0x4, fixed_abs, tag = 'smem constant byte address 0x4 - core index']
  #allocation1 [shape = 'u32[72,128]{1,0:T(1,128)}', space=vmem, size = 0x9000, scoped, tag = 'internal scratch']
  #allocation2 [shape = 'f32[1]{0:T(128)S(6)}', space=smem, size = 0x200, scoped, tag = 'scoped memory for custom_model_forward.1']
  %s0 = inlined_call_operand.vmem [shape: f32[3], index: 0, kind: input, shape index: {}]
  %s1 = inlined_call_operand.<no memory space> [shape: f32[1], index: 1, kind: input, shape index: {}]
  %s2 = inlined_call_operand.vmem [shape: f32[3,16,128], index: 2, kind: input, shape index: {}]
  %s3 = inlined_call_operand.vmem [shape: f32[16,128], index: 3, kind: output, shape index: {}]
  %s4 = sld [smem:[#allocation0]]
  $region26: #{custom_model_forward.1} parent=0
    _
  %s6 = ssub.s32 1, %s4
  %s7 = scalar_select 0, %s6, %s4
  %8 = sst [smem:[#allocation2]] %s1
  $region1: #{custom_model_forward.1} parent=0
    #allocation3 [shape = 'u8[512]{0}', space=smem, size = 0x200, scoped, tag = 'input window, operand 0, single buffered']
    #allocation4 [shape = 's32[1]{0}', space=sflag, size = 0x4, scoped, tag = 'scoped memory for custom_model_forward.1']
    %9 = vsyncpa [#allocation4], 0
    // Predicated region
    $region2: #{custom_model_forward.1} parent=1 // pred_check
      _
    $region3: #{custom_model_forward.1} parent=1 // pred_check_branch
      %11 = sbr.rel (0) target = $region5
    $region4: #{custom_model_forward.1} parent=1 // pred_region
      %13 = vsyncadd [#allocation4], 0
      %s15 = sshll.u32 %s0, 4
      %s16 = int_to_ptr.vmem [resolvable:$true] %s15
      %18 = dma.vmem_to_smem %s16, 16, [#allocation3], [#allocation4]
    $region5: #{custom_model_forward.1} parent=1 // pred_fallthru
      _
    // Predicated region
    $region6: #{custom_model_forward.1} parent=1 // pred_check
      _
    $region7: #{custom_model_forward.1} parent=1 // pred_check_branch
      %20 = sbr.rel (0) target = $region9
    $region8: #{custom_model_forward.1} parent=1 // pred_region
      _
    $region9: #{custom_model_forward.1} parent=1 // pred_fallthru
      _
    // Predicated region
    $region10: #{custom_model_forward.1} parent=1 // pred_check
      _
    $region11: #{custom_model_forward.1} parent=1 // pred_check_branch
      %22 = sbr.rel (0) target = $region13
    $region12: #{custom_model_forward.1} parent=1 // pred_region
      _
    $region13: #{custom_model_forward.1} parent=1 // pred_fallthru
      _
    // Predicated region
    $region14: #{custom_model_forward.1} parent=1 // pred_check
      _
    $region15: #{custom_model_forward.1} parent=1 // pred_check_branch
      %24 = sbr.rel (0) target = $region17
    $region16: #{custom_model_forward.1} parent=1 // pred_region
      %26 = dma.done [#allocation4], 16
    $region17: #{custom_model_forward.1} parent=1 // pred_fallthru
      _
    %27 = sfence
    %s28 = sld [smem:[#allocation3]]
    %s29 = sld [smem:[#allocation3 + $0x1]]
    %s30 = sld [smem:[#allocation3 + $0x2]]
    %s31 = sld [smem:[#allocation2]]
    %v32 = vld [vmem:[%s2] sm:$0xff]
    %v33 = vld [vmem:[%s2 + $0x8] sm:$0xff]
    %v34 = vstv %s28
    %v35 = vmul.f32 %v32, %v34
    %v36 = vmul.f32 %v33, %v34
    %s37 = scalar_lea.vmem %s2, 16
    %v38 = vld [vmem:[%s37] sm:$0xff]
    %v39 = vld [vmem:[%s37 + $0x8] sm:$0xff]
    %v40 = vstv %s29
    %v41 = vmul.f32 %v38, %v40
    %v42 = vmul.f32 %v39, %v40
    %v43 = vadd.f32 %v35, %v41
    %v44 = vadd.f32 %v36, %v42
    %s45 = scalar_lea.vmem %s2, 32
    %v46 = vld [vmem:[%s45] sm:$0xff]
    %v47 = vld [vmem:[%s45 + $0x8] sm:$0xff]
    %v48 = vstv %s30
    %v49 = vmul.f32 %v46, %v48
    %v50 = vmul.f32 %v47, %v48
    %v51 = vadd.f32 %v43, %v49
    %v52 = vadd.f32 %v44, %v50
    %v53 = vstv %s31
    %v54 = vadd.f32 %v51, %v53
    %v55 = vadd.f32 %v52, %v53
    %v56 = vsub.f32 0.0, %v54
    %v57 = vsub.f32 0.0, %v55
    %v58 = vmul.f32 %v56, 1.442695
    %v59 = vpow.pop %v58
    %v60 = vmul.f32 %v57, 1.442695
    %v61 = vpow.pop %v60
    %v62 = vadd.f32 %v59, 1.0
    %v63 = vadd.f32 %v61, 1.0
    %v64 = vrcp.pop %v62
    %v65 = vrcp.pop %v63
    %66 = vst [vmem:[%s3] sm:$0xff] %v64
    %67 = vst [vmem:[%s3 + $0x8] sm:$0xff] %v65
    // Predicated region
    $region18: #{custom_model_forward.1} parent=1 // pred_check
      _
    $region19: #{custom_model_forward.1} parent=1 // pred_check_branch
      %69 = sbr.rel (0) target = $region21
    $region20: #{custom_model_forward.1} parent=1 // pred_region
      _
    $region21: #{custom_model_forward.1} parent=1 // pred_fallthru
      _
    // Predicated region
    $region22: #{custom_model_forward.1} parent=1 // pred_check
      _
    $region23: #{custom_model_forward.1} parent=1 // pred_check_branch
      %71 = sbr.rel (0) target = $region25
    $region24: #{custom_model_forward.1} parent=1 // pred_region
      _
    $region25: #{custom_model_forward.1} parent=1 // pred_fallthru
      _
    %72 = vsyncpa [#allocation4], 1

</llo_original>
